<compile_context>
chip_gen: v5e
topology: v5e:2x2
jax: 0.10.0
libtpu: 0.0.40
codegen_flags: <defaults>
</compile_context>

<pallas_src>
import functools

import jax
import jax.numpy as jnp
from jax import lax
from jax.experimental import pallas as pl
from jax.experimental.pallas import tpu as pltpu

KERNEL_SIZE = 5
PAD = 2               # padding='same' with k=5, stride=1
NEG_SLOPE = 0.01      # F.leaky_relu default negative_slope


def _res_subblock_kernel(x_ref, w_ref, b_ref, o_ref, xpad_ref, *,
                         seq_len, batch_tile, num_layers):
    # x_ref:    (TB, C, L)                    input tile, PyTorch NCL layout
    # w_ref:    (num_layers, 5, C, C) bf16    per-tap weights W[:, :, k]
    # b_ref:    (num_layers, C, 1)    f32     biases
    # o_ref:    (TB, C, L)                    output tile (NCL)
    # xpad_ref: VMEM (C, TB*(L+4))    bf16    padded activation, batch along lanes
    C = x_ref.shape[1]
    L = seq_len
    TB = batch_tile
    Lp = L + 2 * PAD          # padded lanes per batch element
    Ltot = TB * Lp            # total lanes in the activation scratch
    Lout = Ltot - 2 * PAD     # per-layer conv result width (all batches at once)

    # keep-mask over the conv-result lanes: lane j belongs to real data iff
    # (j mod Lp) < L; everything else is a per-batch halo that must stay zero.
    lane = lax.broadcasted_iota(jnp.int32, (1, Lout), 1)
    keep = (lane % Lp) < L

    # Stage the input: zero the whole scratch once (halos), then copy each
    # batch element's data lanes, casting to bf16 for the MXU.
    xpad_ref[...] = jnp.zeros((C, Ltot), jnp.bfloat16)
    for b in range(TB):
        xpad_ref[:, b * Lp + PAD:b * Lp + PAD + L] = x_ref[b].astype(jnp.bfloat16)

    for layer in range(num_layers):      # static unroll; activations stay in VMEM
        # 'same' conv as 5 accumulating per-tap matmuls:
        #   acc[:, j] = sum_k W_k @ xpad[:, j + k]     (f32 accumulation)
        acc = jnp.zeros((C, Lout), jnp.float32)
        for k in range(KERNEL_SIZE):
            acc = acc + jnp.dot(w_ref[layer, k], xpad_ref[:, k:k + Lout],
                                preferred_element_type=jnp.float32)
        acc = acc + b_ref[layer]                          # (C, 1) broadcast, f32
        act = jnp.where(acc >= 0, acc, NEG_SLOPE * acc)   # leaky_relu, f32

        if layer + 1 < num_layers:
            # Feed the next layer: write data lanes, re-zero halo lanes via the
            # mask select (never optimize this away per-core — see review).
            xpad_ref[:, PAD:PAD + Lout] = (
                jnp.where(keep, act, 0.0).astype(jnp.bfloat16))
        else:
            # Batch element b's outputs live at lanes [b*Lp, b*Lp + L).
            for b in range(TB):
                o_ref[b] = act[:, b * Lp:b * Lp + L].astype(o_ref.dtype)


def _prepare_params(params):
    """Stack PyTorch Conv1d params for the kernel (done once per forward).

    weight (C_out, C_in, K) -> (num_layers, K, C_out, C_in) bf16
    bias   (C,)             -> (num_layers, C, 1)            f32
    """
    ws, bs = [], []
    for w, b in params:
        c_out, _, _ = w.shape
        ws.append(jnp.transpose(w, (2, 0, 1)))      # (K, C_out, C_in)
        bs.append(b.reshape(c_out, 1))
    w_stack = jnp.stack(ws, axis=0).astype(jnp.bfloat16)
    b_stack = jnp.stack(bs, axis=0).astype(jnp.float32)
    return w_stack, b_stack


def res_subblock_forward(x_ncl, params, *, batch_tile=None):
    """PyTorch-semantics forward. x_ncl: (N, C, L) like nn.Conv1d input."""
    num_layers = len(params)
    N, C, L = x_ncl.shape
    TB = min(N, 8) if batch_tile is None else min(batch_tile, N)
    assert N % TB == 0, "batch must be divisible by the batch tile"
    grid = (N // TB,)
    Lp = L + 2 * PAD

    w_stack, b_stack = _prepare_params(params)
    kernel = functools.partial(_res_subblock_kernel, seq_len=L,
                               batch_tile=TB, num_layers=num_layers)

    # Single grid step -> keep it on one core; multiple steps -> shard batch.
    dim_sem = ("parallel",) if grid[0] > 1 else ("arbitrary",)

    out = pl.pallas_call(
        kernel,
        out_shape=jax.ShapeDtypeStruct((N, C, L), x_ncl.dtype),
        grid_spec=pltpu.PrefetchScalarGridSpec(
            num_scalar_prefetch=0,
            grid=grid,
            in_specs=[
                pl.BlockSpec((TB, C, L), lambda n: (n, 0, 0)),
                pl.BlockSpec((num_layers, KERNEL_SIZE, C, C),
                             lambda n: (0, 0, 0, 0)),
                pl.BlockSpec((num_layers, C, 1), lambda n: (0, 0, 0)),
            ],
            out_specs=pl.BlockSpec((TB, C, L), lambda n: (n, 0, 0)),
            scratch_shapes=[pltpu.VMEM((C, TB * Lp), jnp.bfloat16)],
        ),
        compiler_params=pltpu.CompilerParams(dimension_semantics=dim_sem),
    )(x_ncl, w_stack, b_stack)
    return out


def res_subblock_reference_f32(x_ncl, params):
    """Pure-JAX f32 reference (XLA conv) — module semantics."""
    x = jnp.transpose(x_ncl, (0, 2, 1))
    for w, b in params:
        w_taps = jnp.transpose(w, (2, 1, 0))          # (K, C_in, C_out) for WIO
        y = lax.conv_general_dilated(
            x, w_taps, window_strides=(1,), padding="SAME",
            dimension_numbers=("NWC", "WIO", "NWC"))
        y = y + b[None, None, :]
        x = jnp.where(y >= 0, y, NEG_SLOPE * y)
    return jnp.transpose(x, (0, 2, 1))


def res_subblock_reference_bf16(x_ncl, params):
    """Reference mirroring the kernel's mixed precision (bf16 operands,
    f32 accumulate, f32 bias/leaky_relu, bf16 activation handoff)."""
    x = jnp.transpose(x_ncl, (0, 2, 1))
    x = x.astype(jnp.bfloat16).astype(jnp.float32)
    num_layers = len(params)
    for i, (w, b) in enumerate(params):
        w_taps = (jnp.transpose(w, (2, 1, 0))
                  .astype(jnp.bfloat16).astype(jnp.float32))
        y = lax.conv_general_dilated(
            x, w_taps, window_strides=(1,), padding="SAME",
            dimension_numbers=("NWC", "WIO", "NWC"),
            preferred_element_type=jnp.float32)
        y = y + b[None, None, :]
        a = jnp.where(y >= 0, y, NEG_SLOPE * y)
        x = a if i + 1 == num_layers else a.astype(jnp.bfloat16).astype(jnp.float32)
    return jnp.transpose(x, (0, 2, 1))


if __name__ == "__main__":
    key = jax.random.PRNGKey(0)
    # config.hidden = 32, len_res_subblock = 2; input (batch, hidden, seq)
    N, C, L = 2, 32, 16
    len_res_subblock = 2

    keys = jax.random.split(key, 1 + 2 * len_res_subblock)
    x = jax.random.normal(keys[0], (N, C, L), dtype=jnp.float32)

    # Deterministic parameter init (Conv1d-style uniform bounds).
    params = []
    for i in range(len_res_subblock):
        wk, bk = keys[1 + 2 * i], keys[2 + 2 * i]
        fan_in = C * KERNEL_SIZE
        bound = 1.0 / (fan_in ** 0.5)
        w = jax.random.uniform(wk, (C, C, KERNEL_SIZE), jnp.float32, -bound, bound)
        b = jax.random.uniform(bk, (C,), jnp.float32, -bound, bound)
        params.append((w, b))

    fwd = jax.jit(res_subblock_forward)
    out = jax.block_until_ready(fwd(x, params))

    ref_bf16 = jax.block_until_ready(res_subblock_reference_bf16(x, params))
    ref_f32 = jax.block_until_ready(res_subblock_reference_f32(x, params))

    assert out.shape == (N, C, L), out.shape
    err_bf16 = float(jnp.max(jnp.abs(out - ref_bf16)))   # same-precision reference
    err_f32 = float(jnp.max(jnp.abs(out - ref_f32)))     # full-f32 semantic check
    assert err_bf16 < 2e-3, err_bf16
    assert err_f32 < 5e-2, err_f32
    print("KERNEL_OK")
</pallas_src>

<mosaic_0001>
module attributes {stable_mosaic.version = 11 : i64} {
  func.func @_res_subblock_kernel(%arg0: i32, %arg1: memref<2x32x16xf32, #tpu.memory_space<vmem>>, %arg2: memref<2x5x32x32xbf16, #tpu.memory_space<vmem>>, %arg3: memref<2x32x1xf32, #tpu.memory_space<vmem>>, %arg4: memref<2x32x16xf32, #tpu.memory_space<vmem>>, %arg5: memref<32x40xbf16, #tpu.memory_space<vmem>>) attributes {dimension_semantics = [#tpu.dimension_semantics<arbitrary>], iteration_bounds = array<i64: 1>, scalar_prefetch = 0 : i64, scratch_operands = 1 : i64, tpu.core_type = #tpu.core_type<tc>, window_params = [{transform_indices = @transform_0, window_bounds = array<i64: 2, 32, 16>}, {pipeline_mode = #tpu.pipeline_mode<synchronous>, transform_indices = @transform_1, window_bounds = array<i64: 2, 5, 32, 32>}, {pipeline_mode = #tpu.pipeline_mode<synchronous>, transform_indices = @transform_2, window_bounds = array<i64: 2, 32, 1>}, {transform_indices = @transform_3, window_bounds = array<i64: 2, 32, 16>}]} {
    %0 = tpu.iota {dimensions = array<i32: 1>} : vector<1x36xi32>
    %c20_i32 = arith.constant 20 : i32
    %c0_i32 = arith.constant 0 : i32
    %1 = arith.cmpi eq, %c20_i32, %c0_i32 : i32
    %c1_i32 = arith.constant 1 : i32
    %2 = arith.select %1, %c1_i32, %c20_i32 : i32
    %3 = vector.broadcast %2 : i32 to vector<1x36xi32>
    %4 = arith.remsi %0, %3 : vector<1x36xi32>
    %c0_i32_0 = arith.constant 0 : i32
    %5 = vector.broadcast %c0_i32_0 : i32 to vector<1x36xi32>
    %6 = arith.cmpi ne, %4, %5 : vector<1x36xi32>
    %c0_i32_1 = arith.constant 0 : i32
    %7 = vector.broadcast %c0_i32_1 : i32 to vector<1x36xi32>
    %8 = arith.cmpi slt, %4, %7 : vector<1x36xi32>
    %c0_i32_2 = arith.constant 0 : i32
    %9 = arith.cmpi slt, %2, %c0_i32_2 : i32
    %10 = vector.broadcast %9 : i1 to vector<1x36xi1>
    %11 = vector.broadcast %10 : vector<1x36xi1> to vector<1x36xi1>
    %12 = arith.xori %8, %11 : vector<1x36xi1>
    %13 = arith.andi %12, %6 : vector<1x36xi1>
    %14 = vector.broadcast %2 : i32 to vector<1x36xi32>
    %15 = arith.addi %4, %14 : vector<1x36xi32>
    %16 = arith.select %13, %15, %4 : vector<1x36xi1>, vector<1x36xi32>
    %c16_i32 = arith.constant 16 : i32
    %17 = vector.broadcast %c16_i32 : i32 to vector<1x36xi32>
    %18 = arith.cmpi slt, %16, %17 : vector<1x36xi32>
    %cst = arith.constant 0.000000e+00 : bf16
    %19 = vector.broadcast %cst : bf16 to vector<32x40xbf16>
    %c0 = arith.constant 0 : index
    %c0_3 = arith.constant 0 : index
    %20 = vector.load %arg5[%c0, %c0_3] : memref<32x40xbf16, #tpu.memory_space<vmem>>, vector<32x40xbf16>
    tpu.vector_store %arg5[%c0, %c0_3], %19 {strides = array<i32>} : memref<32x40xbf16, #tpu.memory_space<vmem>>, vector<32x40xbf16>,
    %c0_4 = arith.constant 0 : index
    %c0_5 = arith.constant 0 : index
    %c0_6 = arith.constant 0 : index
    %21 = vector.load %arg1[%c0_4, %c0_5, %c0_6] : memref<2x32x16xf32, #tpu.memory_space<vmem>>, vector<1x32x16xf32>
    %22 = vector.shape_cast %21 : vector<1x32x16xf32> to vector<32x16xf32>
    %23 = arith.truncf %22 : vector<32x16xf32> to vector<32x16xbf16>
    %c0_7 = arith.constant 0 : index
    %c2 = arith.constant 2 : index
    %24 = vector.load %arg5[%c0_7, %c2] : memref<32x40xbf16, #tpu.memory_space<vmem>>, vector<32x16xbf16>
    tpu.vector_store %arg5[%c0_7, %c2], %23 {strides = array<i32>} : memref<32x40xbf16, #tpu.memory_space<vmem>>, vector<32x16xbf16>,
    %c1 = arith.constant 1 : index
    %c0_8 = arith.constant 0 : index
    %c0_9 = arith.constant 0 : index
    %25 = vector.load %arg1[%c1, %c0_8, %c0_9] : memref<2x32x16xf32, #tpu.memory_space<vmem>>, vector<1x32x16xf32>
    %26 = vector.shape_cast %25 : vector<1x32x16xf32> to vector<32x16xf32>
    %27 = arith.truncf %26 : vector<32x16xf32> to vector<32x16xbf16>
    %c0_10 = arith.constant 0 : index
    %c22 = arith.constant 22 : index
    %28 = vector.load %arg5[%c0_10, %c22] : memref<32x40xbf16, #tpu.memory_space<vmem>>, vector<32x16xbf16>
    tpu.vector_store %arg5[%c0_10, %c22], %27 {strides = array<i32>} : memref<32x40xbf16, #tpu.memory_space<vmem>>, vector<32x16xbf16>,
    %cst_11 = arith.constant 0.000000e+00 : f32
    %29 = vector.broadcast %cst_11 : f32 to vector<32x36xf32>
    %c0_12 = arith.constant 0 : index
    %c0_13 = arith.constant 0 : index
    %c0_14 = arith.constant 0 : index
    %c0_15 = arith.constant 0 : index
    %30 = vector.load %arg2[%c0_12, %c0_13, %c0_14, %c0_15] : memref<2x5x32x32xbf16, #tpu.memory_space<vmem>>, vector<1x1x32x32xbf16>
    %31 = vector.shape_cast %30 : vector<1x1x32x32xbf16> to vector<32x32xbf16>
    %c0_16 = arith.constant 0 : index
    %c0_17 = arith.constant 0 : index
    %32 = vector.load %arg5[%c0_16, %c0_17] : memref<32x40xbf16, #tpu.memory_space<vmem>>, vector<32x36xbf16>
    %cst_18 = arith.constant dense<0.000000e+00> : vector<32x36xf32>
    %33 = tpu.matmul %31, %32, %cst_18 {dimension_numbers = #tpu.dot_dimension_numbers<[1], [0], [0], [1], [0, 0, 1, 1], [], []>} : vector<32x32xbf16>, vector<32x36xbf16>, vector<32x36xf32> -> vector<32x36xf32>
    %34 = arith.addf %29, %33 : vector<32x36xf32>
    %c0_19 = arith.constant 0 : index
    %c1_20 = arith.constant 1 : index
    %c0_21 = arith.constant 0 : index
    %c0_22 = arith.constant 0 : index
    %35 = vector.load %arg2[%c0_19, %c1_20, %c0_21, %c0_22] : memref<2x5x32x32xbf16, #tpu.memory_space<vmem>>, vector<1x1x32x32xbf16>
    %36 = vector.shape_cast %35 : vector<1x1x32x32xbf16> to vector<32x32xbf16>
    %c0_23 = arith.constant 0 : index
    %c1_24 = arith.constant 1 : index
    %37 = vector.load %arg5[%c0_23, %c1_24] : memref<32x40xbf16, #tpu.memory_space<vmem>>, vector<32x36xbf16>
    %cst_25 = arith.constant dense<0.000000e+00> : vector<32x36xf32>
    %38 = tpu.matmul %36, %37, %cst_25 {dimension_numbers = #tpu.dot_dimension_numbers<[1], [0], [0], [1], [0, 0, 1, 1], [], []>} : vector<32x32xbf16>, vector<32x36xbf16>, vector<32x36xf32> -> vector<32x36xf32>
    %39 = arith.addf %34, %38 : vector<32x36xf32>
    %c0_26 = arith.constant 0 : index
    %c2_27 = arith.constant 2 : index
    %c0_28 = arith.constant 0 : index
    %c0_29 = arith.constant 0 : index
    %40 = vector.load %arg2[%c0_26, %c2_27, %c0_28, %c0_29] : memref<2x5x32x32xbf16, #tpu.memory_space<vmem>>, vector<1x1x32x32xbf16>
    %41 = vector.shape_cast %40 : vector<1x1x32x32xbf16> to vector<32x32xbf16>
    %c0_30 = arith.constant 0 : index
    %c2_31 = arith.constant 2 : index
    %42 = vector.load %arg5[%c0_30, %c2_31] : memref<32x40xbf16, #tpu.memory_space<vmem>>, vector<32x36xbf16>
    %cst_32 = arith.constant dense<0.000000e+00> : vector<32x36xf32>
    %43 = tpu.matmul %41, %42, %cst_32 {dimension_numbers = #tpu.dot_dimension_numbers<[1], [0], [0], [1], [0, 0, 1, 1], [], []>} : vector<32x32xbf16>, vector<32x36xbf16>, vector<32x36xf32> -> vector<32x36xf32>
    %44 = arith.addf %39, %43 : vector<32x36xf32>
    %c0_33 = arith.constant 0 : index
    %c3 = arith.constant 3 : index
    %c0_34 = arith.constant 0 : index
    %c0_35 = arith.constant 0 : index
    %45 = vector.load %arg2[%c0_33, %c3, %c0_34, %c0_35] : memref<2x5x32x32xbf16, #tpu.memory_space<vmem>>, vector<1x1x32x32xbf16>
    %46 = vector.shape_cast %45 : vector<1x1x32x32xbf16> to vector<32x32xbf16>
    %c0_36 = arith.constant 0 : index
    %c3_37 = arith.constant 3 : index
    %47 = vector.load %arg5[%c0_36, %c3_37] : memref<32x40xbf16, #tpu.memory_space<vmem>>, vector<32x36xbf16>
    %cst_38 = arith.constant dense<0.000000e+00> : vector<32x36xf32>
    %48 = tpu.matmul %46, %47, %cst_38 {dimension_numbers = #tpu.dot_dimension_numbers<[1], [0], [0], [1], [0, 0, 1, 1], [], []>} : vector<32x32xbf16>, vector<32x36xbf16>, vector<32x36xf32> -> vector<32x36xf32>
    %49 = arith.addf %44, %48 : vector<32x36xf32>
    %c0_39 = arith.constant 0 : index
    %c4 = arith.constant 4 : index
    %c0_40 = arith.constant 0 : index
    %c0_41 = arith.constant 0 : index
    %50 = vector.load %arg2[%c0_39, %c4, %c0_40, %c0_41] : memref<2x5x32x32xbf16, #tpu.memory_space<vmem>>, vector<1x1x32x32xbf16>
    %51 = vector.shape_cast %50 : vector<1x1x32x32xbf16> to vector<32x32xbf16>
    %c0_42 = arith.constant 0 : index
    %c4_43 = arith.constant 4 : index
    %52 = vector.load %arg5[%c0_42, %c4_43] : memref<32x40xbf16, #tpu.memory_space<vmem>>, vector<32x36xbf16>
    %cst_44 = arith.constant dense<0.000000e+00> : vector<32x36xf32>
    %53 = tpu.matmul %51, %52, %cst_44 {dimension_numbers = #tpu.dot_dimension_numbers<[1], [0], [0], [1], [0, 0, 1, 1], [], []>} : vector<32x32xbf16>, vector<32x36xbf16>, vector<32x36xf32> -> vector<32x36xf32>
    %54 = arith.addf %49, %53 : vector<32x36xf32>
    %c0_45 = arith.constant 0 : index
    %c0_46 = arith.constant 0 : index
    %c0_47 = arith.constant 0 : index
    %55 = vector.load %arg3[%c0_45, %c0_46, %c0_47] : memref<2x32x1xf32, #tpu.memory_space<vmem>>, vector<1x32x1xf32>
    %56 = vector.shape_cast %55 : vector<1x32x1xf32> to vector<32x1xf32>
    %57 = vector.broadcast %56 : vector<32x1xf32> to vector<32x36xf32>
    %58 = arith.addf %54, %57 : vector<32x36xf32>
    %cst_48 = arith.constant 0.000000e+00 : f32
    %59 = vector.broadcast %cst_48 : f32 to vector<32x36xf32>
    %60 = arith.cmpf oge, %58, %59 : vector<32x36xf32>
    %cst_49 = arith.constant 0.00999999977 : f32
    %61 = vector.broadcast %cst_49 : f32 to vector<32x36xf32>
    %62 = arith.mulf %61, %58 : vector<32x36xf32>
    %63 = arith.select %60, %58, %62 : vector<32x36xi1>, vector<32x36xf32>
    %cst_50 = arith.constant 0.000000e+00 : f32
    %64 = vector.shape_cast %18 : vector<1x36xi1> to vector<1x36xi1>
    %65 = vector.broadcast %64 : vector<1x36xi1> to vector<32x36xi1>
    %66 = vector.broadcast %cst_50 : f32 to vector<32x36xf32>
    %67 = arith.select %65, %63, %66 : vector<32x36xi1>, vector<32x36xf32>
    %68 = arith.truncf %67 : vector<32x36xf32> to vector<32x36xbf16>
    %c0_51 = arith.constant 0 : index
    %c2_52 = arith.constant 2 : index
    %69 = vector.load %arg5[%c0_51, %c2_52] : memref<32x40xbf16, #tpu.memory_space<vmem>>, vector<32x36xbf16>
    tpu.vector_store %arg5[%c0_51, %c2_52], %68 {strides = array<i32>} : memref<32x40xbf16, #tpu.memory_space<vmem>>, vector<32x36xbf16>,
    %cst_53 = arith.constant 0.000000e+00 : f32
    %70 = vector.broadcast %cst_53 : f32 to vector<32x36xf32>
    %c1_54 = arith.constant 1 : index
    %c0_55 = arith.constant 0 : index
    %c0_56 = arith.constant 0 : index
    %c0_57 = arith.constant 0 : index
    %71 = vector.load %arg2[%c1_54, %c0_55, %c0_56, %c0_57] : memref<2x5x32x32xbf16, #tpu.memory_space<vmem>>, vector<1x1x32x32xbf16>
    %72 = vector.shape_cast %71 : vector<1x1x32x32xbf16> to vector<32x32xbf16>
    %c0_58 = arith.constant 0 : index
    %c0_59 = arith.constant 0 : index
    %73 = vector.load %arg5[%c0_58, %c0_59] : memref<32x40xbf16, #tpu.memory_space<vmem>>, vector<32x36xbf16>
    %cst_60 = arith.constant dense<0.000000e+00> : vector<32x36xf32>
    %74 = tpu.matmul %72, %73, %cst_60 {dimension_numbers = #tpu.dot_dimension_numbers<[1], [0], [0], [1], [0, 0, 1, 1], [], []>} : vector<32x32xbf16>, vector<32x36xbf16>, vector<32x36xf32> -> vector<32x36xf32>
    %75 = arith.addf %70, %74 : vector<32x36xf32>
    %c1_61 = arith.constant 1 : index
    %c1_62 = arith.constant 1 : index
    %c0_63 = arith.constant 0 : index
    %c0_64 = arith.constant 0 : index
    %76 = vector.load %arg2[%c1_61, %c1_62, %c0_63, %c0_64] : memref<2x5x32x32xbf16, #tpu.memory_space<vmem>>, vector<1x1x32x32xbf16>
    %77 = vector.shape_cast %76 : vector<1x1x32x32xbf16> to vector<32x32xbf16>
    %c0_65 = arith.constant 0 : index
    %c1_66 = arith.constant 1 : index
    %78 = vector.load %arg5[%c0_65, %c1_66] : memref<32x40xbf16, #tpu.memory_space<vmem>>, vector<32x36xbf16>
    %cst_67 = arith.constant dense<0.000000e+00> : vector<32x36xf32>
    %79 = tpu.matmul %77, %78, %cst_67 {dimension_numbers = #tpu.dot_dimension_numbers<[1], [0], [0], [1], [0, 0, 1, 1], [], []>} : vector<32x32xbf16>, vector<32x36xbf16>, vector<32x36xf32> -> vector<32x36xf32>
    %80 = arith.addf %75, %79 : vector<32x36xf32>
    %c1_68 = arith.constant 1 : index
    %c2_69 = arith.constant 2 : index
    %c0_70 = arith.constant 0 : index
    %c0_71 = arith.constant 0 : index
    %81 = vector.load %arg2[%c1_68, %c2_69, %c0_70, %c0_71] : memref<2x5x32x32xbf16, #tpu.memory_space<vmem>>, vector<1x1x32x32xbf16>
    %82 = vector.shape_cast %81 : vector<1x1x32x32xbf16> to vector<32x32xbf16>
    %c0_72 = arith.constant 0 : index
    %c2_73 = arith.constant 2 : index
    %83 = vector.load %arg5[%c0_72, %c2_73] : memref<32x40xbf16, #tpu.memory_space<vmem>>, vector<32x36xbf16>
    %cst_74 = arith.constant dense<0.000000e+00> : vector<32x36xf32>
    %84 = tpu.matmul %82, %83, %cst_74 {dimension_numbers = #tpu.dot_dimension_numbers<[1], [0], [0], [1], [0, 0, 1, 1], [], []>} : vector<32x32xbf16>, vector<32x36xbf16>, vector<32x36xf32> -> vector<32x36xf32>
    %85 = arith.addf %80, %84 : vector<32x36xf32>
    %c1_75 = arith.constant 1 : index
    %c3_76 = arith.constant 3 : index
    %c0_77 = arith.constant 0 : index
    %c0_78 = arith.constant 0 : index
    %86 = vector.load %arg2[%c1_75, %c3_76, %c0_77, %c0_78] : memref<2x5x32x32xbf16, #tpu.memory_space<vmem>>, vector<1x1x32x32xbf16>
    %87 = vector.shape_cast %86 : vector<1x1x32x32xbf16> to vector<32x32xbf16>
    %c0_79 = arith.constant 0 : index
    %c3_80 = arith.constant 3 : index
    %88 = vector.load %arg5[%c0_79, %c3_80] : memref<32x40xbf16, #tpu.memory_space<vmem>>, vector<32x36xbf16>
    %cst_81 = arith.constant dense<0.000000e+00> : vector<32x36xf32>
    %89 = tpu.matmul %87, %88, %cst_81 {dimension_numbers = #tpu.dot_dimension_numbers<[1], [0], [0], [1], [0, 0, 1, 1], [], []>} : vector<32x32xbf16>, vector<32x36xbf16>, vector<32x36xf32> -> vector<32x36xf32>
    %90 = arith.addf %85, %89 : vector<32x36xf32>
    %c1_82 = arith.constant 1 : index
    %c4_83 = arith.constant 4 : index
    %c0_84 = arith.constant 0 : index
    %c0_85 = arith.constant 0 : index
    %91 = vector.load %arg2[%c1_82, %c4_83, %c0_84, %c0_85] : memref<2x5x32x32xbf16, #tpu.memory_space<vmem>>, vector<1x1x32x32xbf16>
    %92 = vector.shape_cast %91 : vector<1x1x32x32xbf16> to vector<32x32xbf16>
    %c0_86 = arith.constant 0 : index
    %c4_87 = arith.constant 4 : index
    %93 = vector.load %arg5[%c0_86, %c4_87] : memref<32x40xbf16, #tpu.memory_space<vmem>>, vector<32x36xbf16>
    %cst_88 = arith.constant dense<0.000000e+00> : vector<32x36xf32>
    %94 = tpu.matmul %92, %93, %cst_88 {dimension_numbers = #tpu.dot_dimension_numbers<[1], [0], [0], [1], [0, 0, 1, 1], [], []>} : vector<32x32xbf16>, vector<32x36xbf16>, vector<32x36xf32> -> vector<32x36xf32>
    %95 = arith.addf %90, %94 : vector<32x36xf32>
    %c1_89 = arith.constant 1 : index
    %c0_90 = arith.constant 0 : index
    %c0_91 = arith.constant 0 : index
    %96 = vector.load %arg3[%c1_89, %c0_90, %c0_91] : memref<2x32x1xf32, #tpu.memory_space<vmem>>, vector<1x32x1xf32>
    %97 = vector.shape_cast %96 : vector<1x32x1xf32> to vector<32x1xf32>
    %98 = vector.broadcast %97 : vector<32x1xf32> to vector<32x36xf32>
    %99 = arith.addf %95, %98 : vector<32x36xf32>
    %cst_92 = arith.constant 0.000000e+00 : f32
    %100 = vector.broadcast %cst_92 : f32 to vector<32x36xf32>
    %101 = arith.cmpf oge, %99, %100 : vector<32x36xf32>
    %cst_93 = arith.constant 0.00999999977 : f32
    %102 = vector.broadcast %cst_93 : f32 to vector<32x36xf32>
    %103 = arith.mulf %102, %99 : vector<32x36xf32>
    %104 = arith.select %101, %99, %103 : vector<32x36xi1>, vector<32x36xf32>
    %105 = vector.extract_strided_slice %104 {offsets = [0, 0], sizes = [32, 16], strides = [1, 1]} : vector<32x36xf32> to vector<32x16xf32>
    %c0_94 = arith.constant 0 : index
    %c0_95 = arith.constant 0 : index
    %c0_96 = arith.constant 0 : index
    %106 = vector.load %arg4[%c0_94, %c0_95, %c0_96] : memref<2x32x16xf32, #tpu.memory_space<vmem>>, vector<1x32x16xf32>
    %107 = vector.shape_cast %106 : vector<1x32x16xf32> to vector<32x16xf32>
    %108 = vector.shape_cast %105 : vector<32x16xf32> to vector<1x32x16xf32>
    tpu.vector_store %arg4[%c0_94, %c0_95, %c0_96], %108 {strides = array<i32>} : memref<2x32x16xf32, #tpu.memory_space<vmem>>, vector<1x32x16xf32>,
    %109 = vector.extract_strided_slice %104 {offsets = [0, 20], sizes = [32, 16], strides = [1, 1]} : vector<32x36xf32> to vector<32x16xf32>
    %c1_97 = arith.constant 1 : index
    %c0_98 = arith.constant 0 : index
    %c0_99 = arith.constant 0 : index
    %110 = vector.load %arg4[%c1_97, %c0_98, %c0_99] : memref<2x32x16xf32, #tpu.memory_space<vmem>>, vector<1x32x16xf32>
    %111 = vector.shape_cast %110 : vector<1x32x16xf32> to vector<32x16xf32>
    %112 = vector.shape_cast %109 : vector<32x16xf32> to vector<1x32x16xf32>
    tpu.vector_store %arg4[%c1_97, %c0_98, %c0_99], %112 {strides = array<i32>} : memref<2x32x16xf32, #tpu.memory_space<vmem>>, vector<1x32x16xf32>,
    return
  }
  func.func @transform_0(%arg0: i32) -> (i32, i32, i32) {
    %c0_i32 = arith.constant 0 : i32
    %c0_i32_0 = arith.constant 0 : i32
    %c0_i32_1 = arith.constant 0 : i32
    return %arg0, %c0_i32, %c0_i32_0 : i32, i32, i32
  }
  func.func @transform_1(%arg0: i32) -> (i32, i32, i32, i32) {
    %c0_i32 = arith.constant 0 : i32
    %c0_i32_0 = arith.constant 0 : i32
    %c0_i32_1 = arith.constant 0 : i32
    %c0_i32_2 = arith.constant 0 : i32
    %c0_i32_3 = arith.constant 0 : i32
    return %c0_i32, %c0_i32_0, %c0_i32_1, %c0_i32_2 : i32, i32, i32, i32
  }
  func.func @transform_2(%arg0: i32) -> (i32, i32, i32) {
    %c0_i32 = arith.constant 0 : i32
    %c0_i32_0 = arith.constant 0 : i32
    %c0_i32_1 = arith.constant 0 : i32
    %c0_i32_2 = arith.constant 0 : i32
    return %c0_i32, %c0_i32_0, %c0_i32_1 : i32, i32, i32
  }
  func.func @transform_3(%arg0: i32) -> (i32, i32, i32) {
    %c0_i32 = arith.constant 0 : i32
    %c0_i32_0 = arith.constant 0 : i32
    %c0_i32_1 = arith.constant 0 : i32
    return %arg0, %c0_i32, %c0_i32_0 : i32, i32, i32
  }
}

</mosaic_0001>

<llo_original>
// kernel: res_subblock_forward.1
$region0: #{res_subblock_forward.1}
  #allocation0 [shape = 'u32[]', space=smem, size = 0x4, offset = 0x4, fixed_abs, tag = 'smem constant byte address 0x4 - core index']
  #allocation1 [shape = 'u32[72,128]{1,0:T(1,128)}', space=vmem, size = 0x9000, scoped, tag = 'internal scratch']
  #allocation2 [shape = 'bf16[32,40]{1,0:T(8,128)(2,1)}', space=vmem, size = 0x2000, scoped, tag = 'scratch operand']
  %s0 = inlined_call_operand.vmem [shape: f32[2,32,16], index: 0, kind: input, shape index: {}]
  %s1 = inlined_call_operand.vmem [shape: bf16[2,5,32,32], index: 1, kind: input, shape index: {}]
  %s2 = inlined_call_operand.vmem [shape: f32[2,32,1], index: 2, kind: input, shape index: {}]
  %s3 = inlined_call_operand.vmem [shape: f32[2,32,16], index: 3, kind: output, shape index: {}]
  %s4 = sld [smem:[#allocation0]]
  $region22: #{res_subblock_forward.1} parent=0
    _
  %s6 = ssub.s32 1, %s4
  %s7 = scalar_select 0, %s6, %s4
  // Predicated region
  $region2: #{res_subblock_forward.1} parent=0 // pred_check
    _
  $region3: #{res_subblock_forward.1} parent=0 // pred_check_branch
    %9 = sbr.rel (0) target = $region5
  $region4: #{res_subblock_forward.1} parent=0 // pred_region
    _
  $region5: #{res_subblock_forward.1} parent=0 // pred_fallthru
    _
  // Predicated region
  $region6: #{res_subblock_forward.1} parent=0 // pred_check
    _
  $region7: #{res_subblock_forward.1} parent=0 // pred_check_branch
    %11 = sbr.rel (0) target = $region9
  $region8: #{res_subblock_forward.1} parent=0 // pred_region
    _
  $region9: #{res_subblock_forward.1} parent=0 // pred_fallthru
    _
  // Predicated region
  $region10: #{res_subblock_forward.1} parent=0 // pred_check
    _
  $region11: #{res_subblock_forward.1} parent=0 // pred_check_branch
    %13 = sbr.rel (0) target = $region13
  $region12: #{res_subblock_forward.1} parent=0 // pred_region
    _
  $region13: #{res_subblock_forward.1} parent=0 // pred_fallthru
    _
  %v15 = vlaneseq
  %v16 = vand.u32 %v15, 127
  %vm17 = vcmp.lt.s32.totalorder %v16, 0
  %v18 = vsub.s32 0, %v16
  %v19 = vsel %vm17, %v18, %v16
  %v20 = vand.u32 %v19, 65535
  %v21 = vshrl.u32 %v19, 16
  %v23 = vmul.u32 %v20, 52429
  %v24 = vmul.u32 %v20, 52428
  %v25 = vmul.u32 %v21, 52429
  %v26 = vmul.u32 %v21, 52428
  %v27 = vshll.u32 %v24, 16
  %v28 = vshrl.u32 %v24, 16
  %v29 = vshll.u32 %v25, 16
  %v30 = vshrl.u32 %v25, 16
  %vm31 = vc.u32 %v23, %v27
  %v32 = vsel %vm31, 1, 0
  %v33 = vadd.s32 %v23, %v27
  %v34 = vadd.s32 %v26, %v32
  %vm35 = vc.u32 %v33, %v29
  %v36 = vsel %vm35, 1, 0
  %v37 = vadd.s32 %v33, %v29
  %v38 = vadd.s32 %v34, %v36
  %v39 = vadd.s32 %v38, %v28
  %v40 = vadd.s32 %v39, %v30
  %v41 = vshrl.u32 %v40, 4
  %v42 = vmul.u32 %v41, 20
  %v43 = vsub.s32 %v19, %v42
  %v44 = vsub.s32 0, %v43
  %v45 = vsel %vm17, %v44, %v43
  %vm46 = vcmp.ne.s32.totalorder %v45, 0
  %vm47 = vcmp.lt.s32.totalorder %v45, 0
  %vm48 = vmand %vm47, %vm46
  %v49 = vadd.s32 %v45, 20
  %v50 = vsel %vm48, %v49, %v45
  %vm51 = vcmp.lt.s32.totalorder %v50, 16
  %vm52 = vcmask 322560
  %53 = vst.msk [vmem:[#allocation2] sm:$0xf] %vm52, 0
  %54 = vst.msk [vmem:[#allocation2 + $0x4] sm:$0xf] %vm52, 0
  %55 = vst.msk [vmem:[#allocation2 + $0x8] sm:$0xf] %vm52, 0
  %56 = vst.msk [vmem:[#allocation2 + $0xc] sm:$0xf] %vm52, 0
  %v57 = vld [vmem:[%s0] sm:$0xff]
  %v58 = vld [vmem:[%s0 + $0x8] sm:$0xff]
  %v59 = vld [vmem:[%s0 + $0x10] sm:$0xff]
  %v60 = vld [vmem:[%s0 + $0x18] sm:$0xff]
  %v61 = vpack.c.bf16 %v57, %v57
  %v62 = vpack.c.bf16 %v58, %v58
  %v63 = vpack.c.bf16 %v59, %v59
  %v64 = vpack.c.bf16 %v60, %v60
  %69 = vrot.lane.b32.xlu0 %v61, 2
  %v70 = vpop.permute.xlu0 %69
  %71 = vrot.lane.b32.xlu0 %v62, 2
  %v72 = vpop.permute.xlu0 %71
  %73 = vrot.lane.b32.xlu0 %v63, 2
  %v74 = vpop.permute.xlu0 %73
  %75 = vrot.lane.b32.xlu0 %v64, 2
  %v76 = vpop.permute.xlu0 %75
  %vm81 = vcmask 142352
  %82 = vst.msk [vmem:[#allocation2] sm:$0xf] %vm81, %v70
  %83 = vst.msk [vmem:[#allocation2 + $0x4] sm:$0xf] %vm81, %v72
  %84 = vst.msk [vmem:[#allocation2 + $0x8] sm:$0xf] %vm81, %v74
  %85 = vst.msk [vmem:[#allocation2 + $0xc] sm:$0xf] %vm81, %v76
  %s86 = scalar_lea.vmem %s0, 32
  %v87 = vld [vmem:[%s86] sm:$0xff]
  %v88 = vld [vmem:[%s86 + $0x8] sm:$0xff]
  %v89 = vld [vmem:[%s86 + $0x10] sm:$0xff]
  %v90 = vld [vmem:[%s86 + $0x18] sm:$0xff]
  %v91 = vpack.c.bf16 %v87, %v87
  %v92 = vpack.c.bf16 %v88, %v88
  %v93 = vpack.c.bf16 %v89, %v89
  %v94 = vpack.c.bf16 %v90, %v90
  %99 = vrot.lane.b32.xlu0 %v91, 22
  %v100 = vpop.permute.xlu0 %99
  %101 = vrot.lane.b32.xlu0 %v92, 22
  %v102 = vpop.permute.xlu0 %101
  %103 = vrot.lane.b32.xlu0 %v93, 22
  %v104 = vpop.permute.xlu0 %103
  %105 = vrot.lane.b32.xlu0 %v94, 22
  %v106 = vpop.permute.xlu0 %105
  %vm111 = vcmask 306352
  %112 = vst.msk [vmem:[#allocation2] sm:$0xf] %vm111, %v100
  %113 = vst.msk [vmem:[#allocation2 + $0x4] sm:$0xf] %vm111, %v102
  %114 = vst.msk [vmem:[#allocation2 + $0x8] sm:$0xf] %vm111, %v104
  %115 = vst.msk [vmem:[#allocation2 + $0xc] sm:$0xf] %vm111, %v106
  %v116 = vld [vmem:[%s1] sm:$0xf]
  %v117 = vld [vmem:[%s1 + $0x4] sm:$0xf]
  %v118 = vld [vmem:[%s1 + $0x8] sm:$0xf]
  %v119 = vld [vmem:[%s1 + $0xc] sm:$0xf]
  %v120 = vld [vmem:[#allocation2] sm:$0xf]
  %v121 = vld [vmem:[#allocation2 + $0x4] sm:$0xf]
  %v122 = vld [vmem:[#allocation2 + $0x8] sm:$0xf]
  %v123 = vld [vmem:[#allocation2 + $0xc] sm:$0xf]
  %s124 = scalar_lea.vmem %s1, 16
  %v125 = vld [vmem:[%s124] sm:$0xf]
  %v126 = vld [vmem:[%s124 + $0x4] sm:$0xf]
  %v127 = vld [vmem:[%s124 + $0x8] sm:$0xf]
  %v128 = vld [vmem:[%s124 + $0xc] sm:$0xf]
  %v133 = vunpack.c.l.b16 %v125
  %v134 = vunpack.c.l.b16 %v126
  %v135 = vunpack.c.l.b16 %v127
  %v136 = vunpack.c.l.b16 %v128
  %v137 = vpack.c.b16 %v134, %v133
  %v138 = vpack.c.b16 %v136, %v135
  %v143 = vunpack.c.l.b16 %v120
  %v144 = vunpack.c.l.b16 %v121
  %v145 = vunpack.c.l.b16 %v122
  %v146 = vunpack.c.l.b16 %v123
  %v147 = vpack.c.b16 %v144, %v143
  %v148 = vpack.c.b16 %v146, %v145
  %149 = vrot.lane.b32.xlu0 %v147, 127
  %v150 = vpop.permute.xlu0 %149
  %151 = vrot.lane.b32.xlu0 %v148, 127
  %v152 = vpop.permute.xlu0 %151
  %vm155 = vcmask 261120
  %v157 = vsel %vm155, %v137, 0
  %v160 = vsel %vm155, %v138, 0
  %162 = vmatpush.bf16.msra.mxu0 0
  %163 = vmatpush.bf16.msra.mxu0 0
  %164 = vmatpush.bf16.msra.mxu0 0
  %165 = vmatpush.bf16.msra.mxu0 0
  %166 = vmatpush.bf16.msra.mxu0 0
  %167 = vmatpush.bf16.msra.mxu0 0
  %168 = vmatpush.bf16.msra.mxu0 %v152
  %169 = vmatpush.bf16.msra.mxu0 %v150
  %170 = vmatmul.bf16.gmra.mxu0 %v157
  %v171 = vpop.f32.mrf.mxu0
  %v172 = vadd.f32 0.0, %v171
  %v173 = vpop.f32.mrf.mxu0
  %v174 = vadd.f32 0.0, %v173
  %175 = vmatmul.bf16.gmra.mxu0 %v160
  %v176 = vpop.f32.mrf.mxu0
  %v177 = vadd.f32 0.0, %v176
  %v178 = vpop.f32.mrf.mxu0
  %v179 = vadd.f32 0.0, %v178
  %180 = vdwg.mxu0
  %v185 = vunpack.c.l.b16 %v116
  %v186 = vunpack.c.l.b16 %v117
  %v187 = vunpack.c.l.b16 %v118
  %v188 = vunpack.c.l.b16 %v119
  %v189 = vpack.c.b16 %v186, %v185
  %v190 = vpack.c.b16 %v188, %v187
  %v194 = vsel %vm155, %v189, 0
  %v197 = vsel %vm155, %v190, 0
  %199 = vmatpush.bf16.msra.mxu0 0
  %200 = vmatpush.bf16.msra.mxu0 0
  %201 = vmatpush.bf16.msra.mxu0 0
  %202 = vmatpush.bf16.msra.mxu0 0
  %203 = vmatpush.bf16.msra.mxu0 0
  %204 = vmatpush.bf16.msra.mxu0 0
  %205 = vmatpush.bf16.msra.mxu0 %v148
  %206 = vmatpush.bf16.msra.mxu0 %v147
  %207 = vmatmul.bf16.gmra.mxu0 %v194
  %v208 = vpop.f32.mrf.mxu0
  %v209 = vadd.f32 %v172, %v208
  %v210 = vpop.f32.mrf.mxu0
  %v211 = vadd.f32 %v174, %v210
  %212 = vmatmul.bf16.gmra.mxu0 %v197
  %v213 = vpop.f32.mrf.mxu0
  %v214 = vadd.f32 %v177, %v213
  %v215 = vpop.f32.mrf.mxu0
  %v216 = vadd.f32 %v179, %v215
  %217 = vdwg.mxu0
  %s218 = scalar_lea.vmem %s1, 32
  %v219 = vld [vmem:[%s218] sm:$0xf]
  %v220 = vld [vmem:[%s218 + $0x4] sm:$0xf]
  %v221 = vld [vmem:[%s218 + $0x8] sm:$0xf]
  %v222 = vld [vmem:[%s218 + $0xc] sm:$0xf]
  %v227 = vunpack.c.l.b16 %v219
  %v228 = vunpack.c.l.b16 %v220
  %v229 = vunpack.c.l.b16 %v221
  %v230 = vunpack.c.l.b16 %v222
  %v231 = vpack.c.b16 %v228, %v227
  %v232 = vpack.c.b16 %v230, %v229
  %233 = vrot.lane.b32.xlu0 %v147, 126
  %v234 = vpop.permute.xlu0 %233
  %235 = vrot.lane.b32.xlu0 %v148, 126
  %v236 = vpop.permute.xlu0 %235
  %v240 = vsel %vm155, %v231, 0
  %v243 = vsel %vm155, %v232, 0
  %245 = vmatpush.bf16.msra.mxu0 0
  %246 = vmatpush.bf16.msra.mxu0 0
  %247 = vmatpush.bf16.msra.mxu0 0
  %248 = vmatpush.bf16.msra.mxu0 0
  %249 = vmatpush.bf16.msra.mxu0 0
  %250 = vmatpush.bf16.msra.mxu0 0
  %251 = vmatpush.bf16.msra.mxu0 %v236
  %252 = vmatpush.bf16.msra.mxu0 %v234
  %253 = vmatmul.bf16.gmra.mxu0 %v240
  %v254 = vpop.f32.mrf.mxu0
  %v255 = vadd.f32 0.0, %v254
  %v256 = vpop.f32.mrf.mxu0
  %v257 = vadd.f32 0.0, %v256
  %258 = vmatmul.bf16.gmra.mxu0 %v243
  %v259 = vpop.f32.mrf.mxu0
  %v260 = vadd.f32 0.0, %v259
  %v261 = vpop.f32.mrf.mxu0
  %v262 = vadd.f32 0.0, %v261
  %263 = vdwg.mxu0
  %v264 = vadd.f32 %v209, %v255
  %v265 = vadd.f32 %v211, %v257
  %v266 = vadd.f32 %v214, %v260
  %v267 = vadd.f32 %v216, %v262
  %s268 = scalar_lea.vmem %s1, 48
  %v269 = vld [vmem:[%s268] sm:$0xf]
  %v270 = vld [vmem:[%s268 + $0x4] sm:$0xf]
  %v271 = vld [vmem:[%s268 + $0x8] sm:$0xf]
  %v272 = vld [vmem:[%s268 + $0xc] sm:$0xf]
  %v277 = vunpack.c.l.b16 %v269
  %v278 = vunpack.c.l.b16 %v270
  %v279 = vunpack.c.l.b16 %v271
  %v280 = vunpack.c.l.b16 %v272
  %v281 = vpack.c.b16 %v278, %v277
  %v282 = vpack.c.b16 %v280, %v279
  %283 = vrot.lane.b32.xlu0 %v147, 125
  %v284 = vpop.permute.xlu0 %283
  %285 = vrot.lane.b32.xlu0 %v148, 125
  %v286 = vpop.permute.xlu0 %285
  %v290 = vsel %vm155, %v281, 0
  %v293 = vsel %vm155, %v282, 0
  %295 = vmatpush.bf16.msra.mxu0 0
  %296 = vmatpush.bf16.msra.mxu0 0
  %297 = vmatpush.bf16.msra.mxu0 0
  %298 = vmatpush.bf16.msra.mxu0 0
  %299 = vmatpush.bf16.msra.mxu0 0
  %300 = vmatpush.bf16.msra.mxu0 0
  %301 = vmatpush.bf16.msra.mxu0 %v286
  %302 = vmatpush.bf16.msra.mxu0 %v284
  %303 = vmatmul.bf16.gmra.mxu0 %v290
  %v304 = vpop.f32.mrf.mxu0
  %v305 = vadd.f32 0.0, %v304
  %v306 = vpop.f32.mrf.mxu0
  %v307 = vadd.f32 0.0, %v306
  %308 = vmatmul.bf16.gmra.mxu0 %v293
  %v309 = vpop.f32.mrf.mxu0
  %v310 = vadd.f32 0.0, %v309
  %v311 = vpop.f32.mrf.mxu0
  %v312 = vadd.f32 0.0, %v311
  %313 = vdwg.mxu0
  %v314 = vadd.f32 %v264, %v305
  %v315 = vadd.f32 %v265, %v307
  %v316 = vadd.f32 %v266, %v310
  %v317 = vadd.f32 %v267, %v312
  %s318 = scalar_lea.vmem %s1, 64
  %v319 = vld [vmem:[%s318] sm:$0xf]
  %v320 = vld [vmem:[%s318 + $0x4] sm:$0xf]
  %v321 = vld [vmem:[%s318 + $0x8] sm:$0xf]
  %v322 = vld [vmem:[%s318 + $0xc] sm:$0xf]
  %v327 = vunpack.c.l.b16 %v319
  %v328 = vunpack.c.l.b16 %v320
  %v329 = vunpack.c.l.b16 %v321
  %v330 = vunpack.c.l.b16 %v322
  %v331 = vpack.c.b16 %v328, %v327
  %v332 = vpack.c.b16 %v330, %v329
  %333 = vrot.lane.b32.xlu0 %v147, 124
  %v334 = vpop.permute.xlu0 %333
  %335 = vrot.lane.b32.xlu0 %v148, 124
  %v336 = vpop.permute.xlu0 %335
  %v340 = vsel %vm155, %v331, 0
  %v343 = vsel %vm155, %v332, 0
  %345 = vmatpush.bf16.msra.mxu0 0
  %346 = vmatpush.bf16.msra.mxu0 0
  %347 = vmatpush.bf16.msra.mxu0 0
  %348 = vmatpush.bf16.msra.mxu0 0
  %349 = vmatpush.bf16.msra.mxu0 0
  %350 = vmatpush.bf16.msra.mxu0 0
  %351 = vmatpush.bf16.msra.mxu0 %v336
  %352 = vmatpush.bf16.msra.mxu0 %v334
  %353 = vmatmul.bf16.gmra.mxu0 %v340
  %v354 = vpop.f32.mrf.mxu0
  %v355 = vadd.f32 0.0, %v354
  %v356 = vpop.f32.mrf.mxu0
  %v357 = vadd.f32 0.0, %v356
  %358 = vmatmul.bf16.gmra.mxu0 %v343
  %v359 = vpop.f32.mrf.mxu0
  %v360 = vadd.f32 0.0, %v359
  %v361 = vpop.f32.mrf.mxu0
  %v362 = vadd.f32 0.0, %v361
  %363 = vdwg.mxu0
  %v364 = vadd.f32 %v314, %v355
  %v365 = vadd.f32 %v315, %v357
  %v366 = vadd.f32 %v316, %v360
  %v367 = vadd.f32 %v317, %v362
  %v368 = vld [vmem:[%s2] sm:$0xff]
  %v369 = vld [vmem:[%s2 + $0x8] sm:$0xff]
  %v370 = vld [vmem:[%s2 + $0x10] sm:$0xff]
  %v371 = vld [vmem:[%s2 + $0x18] sm:$0xff]
  %373 = vset.pattern.permute.xlu0 0
  %374 = vperm.xlu0 %373, %v368
  %v375 = vpop.permute.xlu0 %374
  %378 = vset.pattern.permute.xlu0 0
  %379 = vperm.xlu0 %378, %v369
  %v380 = vpop.permute.xlu0 %379
  %383 = vset.pattern.permute.xlu0 0
  %384 = vperm.xlu0 %383, %v370
  %v385 = vpop.permute.xlu0 %384
  %388 = vset.pattern.permute.xlu0 0
  %389 = vperm.xlu0 %388, %v371
  %v390 = vpop.permute.xlu0 %389
  %v392 = vadd.f32 %v364, %v375
  %v393 = vadd.f32 %v365, %v380
  %v394 = vadd.f32 %v366, %v385
  %v395 = vadd.f32 %v367, %v390
  %vm396 = vcmp.ge.f32.partialorder %v392, 0.0
  %vm397 = vcmp.ge.f32.partialorder %v393, 0.0
  %vm398 = vcmp.ge.f32.partialorder %v394, 0.0
  %vm399 = vcmp.ge.f32.partialorder %v395, 0.0
  %v400 = vmul.f32 %v392, 0.01
  %v401 = vmul.f32 %v393, 0.01
  %v402 = vmul.f32 %v394, 0.01
  %v403 = vmul.f32 %v395, 0.01
  %v404 = vsel %vm396, %v392, %v400
  %v405 = vsel %vm397, %v393, %v401
  %v406 = vsel %vm398, %v394, %v402
  %v407 = vsel %vm399, %v395, %v403
  %v408 = vsel %vm51, 1, 0
  %vm409 = vcmp.eq.s32.totalorder %v408, 1
  %v410 = vsel %vm409, %v404, 0.0
  %v411 = vsel %vm409, %v405, 0.0
  %v412 = vsel %vm409, %v406, 0.0
  %v413 = vsel %vm409, %v407, 0.0
  %v414 = vpack.c.bf16 %v410, %v410
  %v415 = vpack.c.bf16 %v411, %v411
  %v416 = vpack.c.bf16 %v412, %v412
  %v417 = vpack.c.bf16 %v413, %v413
  %422 = vrot.lane.b32.xlu0 %v414, 2
  %v423 = vpop.permute.xlu0 %422
  %424 = vrot.lane.b32.xlu0 %v415, 2
  %v425 = vpop.permute.xlu0 %424
  %426 = vrot.lane.b32.xlu0 %v416, 2
  %v427 = vpop.permute.xlu0 %426
  %428 = vrot.lane.b32.xlu0 %v417, 2
  %v429 = vpop.permute.xlu0 %428
  %vm434 = vcmask 306192
  %435 = vst.msk [vmem:[#allocation2] sm:$0xf] %vm434, %v423
  %436 = vst.msk [vmem:[#allocation2 + $0x4] sm:$0xf] %vm434, %v425
  %437 = vst.msk [vmem:[#allocation2 + $0x8] sm:$0xf] %vm434, %v427
  %438 = vst.msk [vmem:[#allocation2 + $0xc] sm:$0xf] %vm434, %v429
  %s439 = scalar_lea.vmem %s1, 80
  %v440 = vld [vmem:[%s439] sm:$0xf]
  %v441 = vld [vmem:[%s439 + $0x4] sm:$0xf]
  %v442 = vld [vmem:[%s439 + $0x8] sm:$0xf]
  %v443 = vld [vmem:[%s439 + $0xc] sm:$0xf]
  %v444 = vld [vmem:[#allocation2] sm:$0xf]
  %v445 = vld [vmem:[#allocation2 + $0x4] sm:$0xf]
  %v446 = vld [vmem:[#allocation2 + $0x8] sm:$0xf]
  %v447 = vld [vmem:[#allocation2 + $0xc] sm:$0xf]
  %s448 = scalar_lea.vmem %s1, 96
  %v449 = vld [vmem:[%s448] sm:$0xf]
  %v450 = vld [vmem:[%s448 + $0x4] sm:$0xf]
  %v451 = vld [vmem:[%s448 + $0x8] sm:$0xf]
  %v452 = vld [vmem:[%s448 + $0xc] sm:$0xf]
  %v457 = vunpack.c.l.b16 %v449
  %v458 = vunpack.c.l.b16 %v450
  %v459 = vunpack.c.l.b16 %v451
  %v460 = vunpack.c.l.b16 %v452
  %v461 = vpack.c.b16 %v458, %v457
  %v462 = vpack.c.b16 %v460, %v459
  %v467 = vunpack.c.l.b16 %v444
  %v468 = vunpack.c.l.b16 %v445
  %v469 = vunpack.c.l.b16 %v446
  %v470 = vunpack.c.l.b16 %v447
  %v471 = vpack.c.b16 %v468, %v467
  %v472 = vpack.c.b16 %v470, %v469
  %473 = vrot.lane.b32.xlu0 %v471, 127
  %v474 = vpop.permute.xlu0 %473
  %475 = vrot.lane.b32.xlu0 %v472, 127
  %v476 = vpop.permute.xlu0 %475
  %v480 = vsel %vm155, %v461, 0
  %v483 = vsel %vm155, %v462, 0
  %485 = vmatpush.bf16.msra.mxu0 0
  %486 = vmatpush.bf16.msra.mxu0 0
  %487 = vmatpush.bf16.msra.mxu0 0
  %488 = vmatpush.bf16.msra.mxu0 0
  %489 = vmatpush.bf16.msra.mxu0 0
  %490 = vmatpush.bf16.msra.mxu0 0
  %491 = vmatpush.bf16.msra.mxu0 %v476
  %492 = vmatpush.bf16.msra.mxu0 %v474
  %493 = vmatmul.bf16.gmra.mxu0 %v480
  %v494 = vpop.f32.mrf.mxu0
  %v495 = vadd.f32 0.0, %v494
  %v496 = vpop.f32.mrf.mxu0
  %v497 = vadd.f32 0.0, %v496
  %498 = vmatmul.bf16.gmra.mxu0 %v483
  %v499 = vpop.f32.mrf.mxu0
  %v500 = vadd.f32 0.0, %v499
  %v501 = vpop.f32.mrf.mxu0
  %v502 = vadd.f32 0.0, %v501
  %503 = vdwg.mxu0
  %v508 = vunpack.c.l.b16 %v440
  %v509 = vunpack.c.l.b16 %v441
  %v510 = vunpack.c.l.b16 %v442
  %v511 = vunpack.c.l.b16 %v443
  %v512 = vpack.c.b16 %v509, %v508
  %v513 = vpack.c.b16 %v511, %v510
  %v517 = vsel %vm155, %v512, 0
  %v520 = vsel %vm155, %v513, 0
  %522 = vmatpush.bf16.msra.mxu0 0
  %523 = vmatpush.bf16.msra.mxu0 0
  %524 = vmatpush.bf16.msra.mxu0 0
  %525 = vmatpush.bf16.msra.mxu0 0
  %526 = vmatpush.bf16.msra.mxu0 0
  %527 = vmatpush.bf16.msra.mxu0 0
  %528 = vmatpush.bf16.msra.mxu0 %v472
  %529 = vmatpush.bf16.msra.mxu0 %v471
  %530 = vmatmul.bf16.gmra.mxu0 %v517
  %v531 = vpop.f32.mrf.mxu0
  %v532 = vadd.f32 %v495, %v531
  %v533 = vpop.f32.mrf.mxu0
  %v534 = vadd.f32 %v497, %v533
  %535 = vmatmul.bf16.gmra.mxu0 %v520
  %v536 = vpop.f32.mrf.mxu0
  %v537 = vadd.f32 %v500, %v536
  %v538 = vpop.f32.mrf.mxu0
  %v539 = vadd.f32 %v502, %v538
  %540 = vdwg.mxu0
  %s541 = scalar_lea.vmem %s1, 112
  %v542 = vld [vmem:[%s541] sm:$0xf]
  %v543 = vld [vmem:[%s541 + $0x4] sm:$0xf]
  %v544 = vld [vmem:[%s541 + $0x8] sm:$0xf]
  %v545 = vld [vmem:[%s541 + $0xc] sm:$0xf]
  %v550 = vunpack.c.l.b16 %v542
  %v551 = vunpack.c.l.b16 %v543
  %v552 = vunpack.c.l.b16 %v544
  %v553 = vunpack.c.l.b16 %v545
  %v554 = vpack.c.b16 %v551, %v550
  %v555 = vpack.c.b16 %v553, %v552
  %556 = vrot.lane.b32.xlu0 %v471, 126
  %v557 = vpop.permute.xlu0 %556
  %558 = vrot.lane.b32.xlu0 %v472, 126
  %v559 = vpop.permute.xlu0 %558
  %v563 = vsel %vm155, %v554, 0
  %v566 = vsel %vm155, %v555, 0
  %568 = vmatpush.bf16.msra.mxu0 0
  %569 = vmatpush.bf16.msra.mxu0 0
  %570 = vmatpush.bf16.msra.mxu0 0
  %571 = vmatpush.bf16.msra.mxu0 0
  %572 = vmatpush.bf16.msra.mxu0 0
  %573 = vmatpush.bf16.msra.mxu0 0
  %574 = vmatpush.bf16.msra.mxu0 %v559
  %575 = vmatpush.bf16.msra.mxu0 %v557
  %576 = vmatmul.bf16.gmra.mxu0 %v563
  %v577 = vpop.f32.mrf.mxu0
  %v578 = vadd.f32 0.0, %v577
  %v579 = vpop.f32.mrf.mxu0
  %v580 = vadd.f32 0.0, %v579
  %581 = vmatmul.bf16.gmra.mxu0 %v566
  %v582 = vpop.f32.mrf.mxu0
  %v583 = vadd.f32 0.0, %v582
  %v584 = vpop.f32.mrf.mxu0
  %v585 = vadd.f32 0.0, %v584
  %586 = vdwg.mxu0
  %v587 = vadd.f32 %v532, %v578
  %v588 = vadd.f32 %v534, %v580
  %v589 = vadd.f32 %v537, %v583
  %v590 = vadd.f32 %v539, %v585
  %s591 = scalar_lea.vmem %s1, 128
  %v592 = vld [vmem:[%s591] sm:$0xf]
  %v593 = vld [vmem:[%s591 + $0x4] sm:$0xf]
  %v594 = vld [vmem:[%s591 + $0x8] sm:$0xf]
  %v595 = vld [vmem:[%s591 + $0xc] sm:$0xf]
  %v600 = vunpack.c.l.b16 %v592
  %v601 = vunpack.c.l.b16 %v593
  %v602 = vunpack.c.l.b16 %v594
  %v603 = vunpack.c.l.b16 %v595
  %v604 = vpack.c.b16 %v601, %v600
  %v605 = vpack.c.b16 %v603, %v602
  %606 = vrot.lane.b32.xlu0 %v471, 125
  %v607 = vpop.permute.xlu0 %606
  %608 = vrot.lane.b32.xlu0 %v472, 125
  %v609 = vpop.permute.xlu0 %608
  %v613 = vsel %vm155, %v604, 0
  %v616 = vsel %vm155, %v605, 0
  %618 = vmatpush.bf16.msra.mxu0 0
  %619 = vmatpush.bf16.msra.mxu0 0
  %620 = vmatpush.bf16.msra.mxu0 0
  %621 = vmatpush.bf16.msra.mxu0 0
  %622 = vmatpush.bf16.msra.mxu0 0
  %623 = vmatpush.bf16.msra.mxu0 0
  %624 = vmatpush.bf16.msra.mxu0 %v609
  %625 = vmatpush.bf16.msra.mxu0 %v607
  %626 = vmatmul.bf16.gmra.mxu0 %v613
  %v627 = vpop.f32.mrf.mxu0
  %v628 = vadd.f32 0.0, %v627
  %v629 = vpop.f32.mrf.mxu0
  %v630 = vadd.f32 0.0, %v629
  %631 = vmatmul.bf16.gmra.mxu0 %v616
  %v632 = vpop.f32.mrf.mxu0
  %v633 = vadd.f32 0.0, %v632
  %v634 = vpop.f32.mrf.mxu0
  %v635 = vadd.f32 0.0, %v634
  %636 = vdwg.mxu0
  %v637 = vadd.f32 %v587, %v628
  %v638 = vadd.f32 %v588, %v630
  %v639 = vadd.f32 %v589, %v633
  %v640 = vadd.f32 %v590, %v635
  %s641 = scalar_lea.vmem %s1, 144
  %v642 = vld [vmem:[%s641] sm:$0xf]
  %v643 = vld [vmem:[%s641 + $0x4] sm:$0xf]
  %v644 = vld [vmem:[%s641 + $0x8] sm:$0xf]
  %v645 = vld [vmem:[%s641 + $0xc] sm:$0xf]
  %v650 = vunpack.c.l.b16 %v642
  %v651 = vunpack.c.l.b16 %v643
  %v652 = vunpack.c.l.b16 %v644
  %v653 = vunpack.c.l.b16 %v645
  %v654 = vpack.c.b16 %v651, %v650
  %v655 = vpack.c.b16 %v653, %v652
  %656 = vrot.lane.b32.xlu0 %v471, 124
  %v657 = vpop.permute.xlu0 %656
  %658 = vrot.lane.b32.xlu0 %v472, 124
  %v659 = vpop.permute.xlu0 %658
  %v663 = vsel %vm155, %v654, 0
  %v666 = vsel %vm155, %v655, 0
  %668 = vmatpush.bf16.msra.mxu0 0
  %669 = vmatpush.bf16.msra.mxu0 0
  %670 = vmatpush.bf16.msra.mxu0 0
  %671 = vmatpush.bf16.msra.mxu0 0
  %672 = vmatpush.bf16.msra.mxu0 0
  %673 = vmatpush.bf16.msra.mxu0 0
  %674 = vmatpush.bf16.msra.mxu0 %v659
  %675 = vmatpush.bf16.msra.mxu0 %v657
  %676 = vmatmul.bf16.gmra.mxu0 %v663
  %v677 = vpop.f32.mrf.mxu0
  %v678 = vadd.f32 0.0, %v677
  %v679 = vpop.f32.mrf.mxu0
  %v680 = vadd.f32 0.0, %v679
  %681 = vmatmul.bf16.gmra.mxu0 %v666
  %v682 = vpop.f32.mrf.mxu0
  %v683 = vadd.f32 0.0, %v682
  %v684 = vpop.f32.mrf.mxu0
  %v685 = vadd.f32 0.0, %v684
  %686 = vdwg.mxu0
  %v687 = vadd.f32 %v637, %v678
  %v688 = vadd.f32 %v638, %v680
  %v689 = vadd.f32 %v639, %v683
  %v690 = vadd.f32 %v640, %v685
  %s691 = scalar_lea.vmem %s2, 32
  %v692 = vld [vmem:[%s691] sm:$0xff]
  %v693 = vld [vmem:[%s691 + $0x8] sm:$0xff]
  %v694 = vld [vmem:[%s691 + $0x10] sm:$0xff]
  %v695 = vld [vmem:[%s691 + $0x18] sm:$0xff]
  %697 = vset.pattern.permute.xlu0 0
  %698 = vperm.xlu0 %697, %v692
  %v699 = vpop.permute.xlu0 %698
  %702 = vset.pattern.permute.xlu0 0
  %703 = vperm.xlu0 %702, %v693
  %v704 = vpop.permute.xlu0 %703
  %707 = vset.pattern.permute.xlu0 0
  %708 = vperm.xlu0 %707, %v694
  %v709 = vpop.permute.xlu0 %708
  %712 = vset.pattern.permute.xlu0 0
  %713 = vperm.xlu0 %712, %v695
  %v714 = vpop.permute.xlu0 %713
  %v716 = vadd.f32 %v687, %v699
  %v717 = vadd.f32 %v688, %v704
  %v718 = vadd.f32 %v689, %v709
  %v719 = vadd.f32 %v690, %v714
  %vm720 = vcmp.ge.f32.partialorder %v716, 0.0
  %vm721 = vcmp.ge.f32.partialorder %v717, 0.0
  %vm722 = vcmp.ge.f32.partialorder %v718, 0.0
  %vm723 = vcmp.ge.f32.partialorder %v719, 0.0
  %v724 = vmul.f32 %v716, 0.01
  %v725 = vmul.f32 %v717, 0.01
  %v726 = vmul.f32 %v718, 0.01
  %v727 = vmul.f32 %v719, 0.01
  %v728 = vsel %vm720, %v716, %v724
  %v729 = vsel %vm721, %v717, %v725
  %v730 = vsel %vm722, %v718, %v726
  %v731 = vsel %vm723, %v719, %v727
  %vm732 = vcmask 130048
  %733 = vst.msk [vmem:[%s3] sm:$0xff] %vm732, %v728
  %734 = vst.msk [vmem:[%s3 + $0x8] sm:$0xff] %vm732, %v729
  %735 = vst.msk [vmem:[%s3 + $0x10] sm:$0xff] %vm732, %v730
  %736 = vst.msk [vmem:[%s3 + $0x18] sm:$0xff] %vm732, %v731
  %741 = vrot.lane.b32.xlu0 %v728, 108
  %v742 = vpop.permute.xlu0 %741
  %743 = vrot.lane.b32.xlu0 %v729, 108
  %v744 = vpop.permute.xlu0 %743
  %745 = vrot.lane.b32.xlu0 %v730, 108
  %v746 = vpop.permute.xlu0 %745
  %747 = vrot.lane.b32.xlu0 %v731, 108
  %v748 = vpop.permute.xlu0 %747
  %s753 = scalar_lea.vmem %s3, 32
  %754 = vst.msk [vmem:[%s753] sm:$0xff] %vm732, %v742
  %755 = vst.msk [vmem:[%s753 + $0x8] sm:$0xff] %vm732, %v744
  %756 = vst.msk [vmem:[%s753 + $0x10] sm:$0xff] %vm732, %v746
  %757 = vst.msk [vmem:[%s753 + $0x18] sm:$0xff] %vm732, %v748
  // Predicated region
  $region14: #{res_subblock_forward.1} parent=0 // pred_check
    _
  $region15: #{res_subblock_forward.1} parent=0 // pred_check_branch
    %759 = sbr.rel (0) target = $region17
  $region16: #{res_subblock_forward.1} parent=0 // pred_region
    _
  $region17: #{res_subblock_forward.1} parent=0 // pred_fallthru
    _
  // Predicated region
  $region18: #{res_subblock_forward.1} parent=0 // pred_check
    _
  $region19: #{res_subblock_forward.1} parent=0 // pred_check_branch
    %761 = sbr.rel (0) target = $region21
  $region20: #{res_subblock_forward.1} parent=0 // pred_region
    _
  $region21: #{res_subblock_forward.1} parent=0 // pred_fallthru
    _

</llo_original>
